<compile_context>
chip_gen: v5e
topology: v5e:2x2
jax: 0.10.0
libtpu: 0.0.40
codegen_flags: <defaults>
</compile_context>

<pallas_src>
import functools

import jax
import jax.numpy as jnp
from jax.experimental import pallas as pl
from jax.experimental.pallas import tpu as pltpu

H1 = 84     # fc1 out features
H2 = 120    # fc2 out features
H1P = 128   # H1 rounded up to a lane-dense 128
H2P = 128   # H2 rounded up to a lane-dense 128


def _round_up(x, m):
    return (x + m - 1) // m * m


def _rulenet_kernel(x_ref, w12_ref, w3_ref, b12_ref, b3_ref, o_ref, *, M_t, off2):
    """One batch tile of the fused 3-layer MLP.

    x_ref   : (TILE_B, M_t)   f32   (cast to bf16 in-vreg; no wrapper HBM pass)
    w12_ref : (R12, 128)      bf16  rows [0:M_t]=w1, [off2:off2+128]=w2 (zero padded)
    w3_ref  : (H2P, OUT_P)    bf16  zero padded
    b12_ref : (8, 128)        f32   rows 0/1 = b1/b2 (zero padded)
    b3_ref  : (8, OUT_P)      f32   row 0 = b3 (zero padded)
    o_ref   : (TILE_B, OUT_P)       lane-dense output
    """
    xb = x_ref[...].astype(jnp.bfloat16)                          # in-kernel cast

    # fc1 + ReLU  (bf16 MXU operands, f32 accumulate, f32 elementwise)
    h1 = jnp.dot(xb, w12_ref[0:M_t, :],
                 preferred_element_type=jnp.float32) + b12_ref[0:1, :]
    h1 = jnp.maximum(h1, 0.0)

    # fc2 + ReLU  (padded rows/cols of w2 are zero -> exact)
    h2 = jnp.dot(h1.astype(jnp.bfloat16), w12_ref[off2:off2 + H1P, :],
                 preferred_element_type=jnp.float32) + b12_ref[1:2, :]
    h2 = jnp.maximum(h2, 0.0)

    # fc3 (lane-dense padded output; extra cols are exactly zero)
    y = jnp.dot(h2.astype(jnp.bfloat16), w3_ref[...],
                preferred_element_type=jnp.float32) + b3_ref[0:1, :]
    o_ref[...] = y.astype(o_ref.dtype)


def pack_params(params, M_t):
    """Pack weights into a narrow bf16 w1/w2 slab + separate bf16 w3 + f32 biases.

    Weights are stored (in_features, out_features) so the kernel computes
    y = x @ W + b (== PyTorch y = x @ W_torch.T + b). Do this ONCE and reuse
    the result across calls.
    """
    OUT = 2 * M_t
    OUT_P = _round_up(OUT, 128)
    off2 = _round_up(M_t, 16)          # sublane-aligned row offset of w2
    R12 = off2 + H1P

    w12 = jnp.zeros((R12, H1P), jnp.bfloat16)
    w12 = w12.at[0:M_t, 0:H1].set(params["w1"].astype(jnp.bfloat16))
    w12 = w12.at[off2:off2 + H1, 0:H2].set(params["w2"].astype(jnp.bfloat16))

    w3 = jnp.zeros((H2P, OUT_P), jnp.bfloat16)
    w3 = w3.at[0:H2, 0:OUT].set(params["w3"].astype(jnp.bfloat16))

    b12 = jnp.zeros((8, H1P), jnp.float32)
    b12 = b12.at[0, 0:H1].set(params["b1"].reshape(-1).astype(jnp.float32))
    b12 = b12.at[1, 0:H2].set(params["b2"].reshape(-1).astype(jnp.float32))

    b3 = jnp.zeros((8, OUT_P), jnp.float32)
    b3 = b3.at[0, 0:OUT].set(params["b3"].reshape(-1).astype(jnp.float32))

    packed = dict(w12=w12, w3=w3, b12=b12, b3=b3)
    meta = dict(M_t=M_t, OUT=OUT, OUT_P=OUT_P, off2=off2, R12=R12)
    return packed, meta


def _choose_tile(B, tile_b):
    """Batch tile: multiple of 8, no near-full-tile overshoot, >=2 tiles for big B."""
    tile_b = max(8, _round_up(int(tile_b), 8))
    n_tiles = pl.cdiv(B, tile_b)
    if B >= 256:
        n_tiles = max(n_tiles, 2)       # keep both v7x TensorCores busy
    return min(_round_up(pl.cdiv(B, n_tiles), 8), _round_up(B, 8))


def rulenet_forward(x, packed, meta, *, tile_b=512, out_dtype=jnp.float32,
                    keep_padding=False):
    """x: (B, M_t) -> (B, 2*M_t) in `out_dtype` (f32 matches the PyTorch module).

    For per-timestep rollouts, stack timesteps along the batch axis and make a
    single call; at small B the kernel cost is pure launch + DMA overhead.
    With keep_padding=True the padded (B_pad, OUT_P) buffer is returned so a
    padding-tolerant consumer avoids an extra HBM->HBM slice pass.
    """
    M_t, OUT, OUT_P = meta["M_t"], meta["OUT"], meta["OUT_P"]
    off2, R12 = meta["off2"], meta["R12"]
    B = x.shape[0]
    assert x.shape[1] == M_t, (x.shape, M_t)

    xf = x.astype(jnp.float32)          # matches torch x.float(); no-op if already f32

    TILE_B = _choose_tile(B, tile_b)
    B_pad = _round_up(B, TILE_B)
    if B_pad != B:
        xf = jnp.pad(xf, ((0, B_pad - B), (0, 0)))
    grid = (B_pad // TILE_B,)

    w12, w3, b12, b3 = packed["w12"], packed["w3"], packed["b12"], packed["b3"]
    kernel = functools.partial(_rulenet_kernel, M_t=M_t, off2=off2)

    out_itemsize = jnp.dtype(out_dtype).itemsize
    flops = 2 * B_pad * (M_t * H1 + H1 * H2 + H2 * OUT)
    resident_bytes = w12.size * 2 + w3.size * 2 + b12.size * 4 + b3.size * 4
    bytes_accessed = (B_pad * M_t * 4 + resident_bytes + B_pad * OUT_P * out_itemsize)

    # Double-buffered activation tiles + resident weights, with slack; capped at
    # v7x's 64 MiB physical VMEM.
    tile_bytes = TILE_B * (M_t * 4 + OUT_P * out_itemsize)
    vmem_limit = int(min(max(4 * (tile_bytes + resident_bytes), 32 << 20), 64 << 20))

    out = pl.pallas_call(
        kernel,
        out_shape=jax.ShapeDtypeStruct((B_pad, OUT_P), out_dtype),
        grid=grid,
        in_specs=[
            pl.BlockSpec((TILE_B, M_t), lambda i: (i, 0)),   # batch-tiled x (f32)
            pl.BlockSpec((R12, H1P), lambda i: (0, 0)),      # resident w1/w2 slab
            pl.BlockSpec((H2P, OUT_P), lambda i: (0, 0)),    # resident w3
            pl.BlockSpec((8, H1P), lambda i: (0, 0)),        # resident b1/b2
            pl.BlockSpec((8, OUT_P), lambda i: (0, 0)),      # resident b3
        ],
        out_specs=pl.BlockSpec((TILE_B, OUT_P), lambda i: (i, 0)),
        compiler_params=pltpu.CompilerParams(
            dimension_semantics=("parallel",),   # shards batch tiles across v7x TCs
            vmem_limit_bytes=vmem_limit,
        ),
        cost_estimate=pl.CostEstimate(
            flops=flops, transcendentals=0, bytes_accessed=bytes_accessed),
    )(xf, w12, w3, b12, b3)

    if keep_padding:
        return out
    if B_pad == B and OUT_P == OUT:
        return out                       # no extra slice pass needed
    return out[:B, :OUT]


def init_params(key, M_t):
    """Deterministic synthetic init; shapes mirror the nn.Linear layers of ruleNet."""
    k1, k2, k3, k4, k5, k6 = jax.random.split(key, 6)
    scale = 0.1
    return {
        # fc1: Linear(M_t, 84)
        "w1": scale * jax.random.normal(k1, (M_t, H1), jnp.float32),
        "b1": scale * jax.random.normal(k2, (1, H1), jnp.float32),
        # fc2: Linear(84, 120)
        "w2": scale * jax.random.normal(k3, (H1, H2), jnp.float32),
        "b2": scale * jax.random.normal(k4, (1, H2), jnp.float32),
        # fc3: Linear(120, 2*M_t)
        "w3": scale * jax.random.normal(k5, (H2, 2 * M_t), jnp.float32),
        "b3": scale * jax.random.normal(k6, (1, 2 * M_t), jnp.float32),
    }


def rulenet_reference_f32(x, p):
    """Pure f32 reference (matches the PyTorch module's math)."""
    h1 = jnp.maximum(x.astype(jnp.float32) @ p["w1"] + p["b1"], 0.0)
    h2 = jnp.maximum(h1 @ p["w2"] + p["b2"], 0.0)
    return h2 @ p["w3"] + p["b3"]


def rulenet_reference_bf16(x, p):
    """Reference mirroring the kernel's bf16-operand / f32-accumulate matmuls."""
    xb = x.astype(jnp.float32).astype(jnp.bfloat16)
    h1 = jnp.maximum(
        jnp.dot(xb, p["w1"].astype(jnp.bfloat16),
                preferred_element_type=jnp.float32) + p["b1"], 0.0)
    h2 = jnp.maximum(
        jnp.dot(h1.astype(jnp.bfloat16), p["w2"].astype(jnp.bfloat16),
                preferred_element_type=jnp.float32) + p["b2"], 0.0)
    return jnp.dot(h2.astype(jnp.bfloat16), p["w3"].astype(jnp.bfloat16),
                   preferred_element_type=jnp.float32) + p["b3"]


if __name__ == "__main__":
    M_t = 32      # time-grid size of the Schrodinger rule net
    batch = 8

    key = jax.random.PRNGKey(0)
    kx, kp = jax.random.split(key)
    x = jax.random.normal(kx, (batch, M_t), jnp.float32)
    params = init_params(kp, M_t)

    # Pack once; reuse across calls (amortizes weight prep / DMA setup).
    packed, meta = pack_params(params, M_t)

    out = jax.block_until_ready(rulenet_forward(x, packed, meta))

    assert out.shape == (batch, 2 * M_t), out.shape
    assert out.dtype == jnp.float32

    # Exact-path check against a reference that mirrors the kernel's bf16 matmuls.
    ref_bf16 = rulenet_reference_bf16(x, params)
    assert jnp.allclose(out, ref_bf16, atol=1e-4, rtol=1e-4), "mismatch vs bf16 reference"

    # Loose semantic check against the pure-f32 PyTorch-equivalent math.
    ref_f32 = rulenet_reference_f32(x, params)
    assert jnp.allclose(out, ref_f32, atol=5e-2, rtol=5e-2), "mismatch vs f32 reference"

    print("KERNEL_OK")
</pallas_src>

<mosaic_0001>
module attributes {stable_mosaic.version = 11 : i64} {
  func.func @_rulenet_kernel(%arg0: i32, %arg1: memref<8x32xf32, #tpu.memory_space<vmem>>, %arg2: memref<160x128xbf16, #tpu.memory_space<vmem>>, %arg3: memref<128x128xbf16, #tpu.memory_space<vmem>>, %arg4: memref<8x128xf32, #tpu.memory_space<vmem>>, %arg5: memref<8x128xf32, #tpu.memory_space<vmem>>, %arg6: memref<8x128xf32, #tpu.memory_space<vmem>>) attributes {dimension_semantics = [#tpu.dimension_semantics<parallel>], iteration_bounds = array<i64: 1>, scalar_prefetch = 0 : i64, scratch_operands = 0 : i64, tpu.core_type = #tpu.core_type<tc>, window_params = [{transform_indices = @transform_0, window_bounds = array<i64: 8, 32>}, {pipeline_mode = #tpu.pipeline_mode<synchronous>, transform_indices = @transform_1, window_bounds = array<i64: 160, 128>}, {pipeline_mode = #tpu.pipeline_mode<synchronous>, transform_indices = @transform_2, window_bounds = array<i64: 128, 128>}, {pipeline_mode = #tpu.pipeline_mode<synchronous>, transform_indices = @transform_3, window_bounds = array<i64: 8, 128>}, {pipeline_mode = #tpu.pipeline_mode<synchronous>, transform_indices = @transform_4, window_bounds = array<i64: 8, 128>}, {transform_indices = @transform_5, window_bounds = array<i64: 8, 128>}]} {
    %c0 = arith.constant 0 : index
    %c0_0 = arith.constant 0 : index
    %0 = vector.load %arg1[%c0, %c0_0] : memref<8x32xf32, #tpu.memory_space<vmem>>, vector<8x32xf32>
    %1 = arith.truncf %0 : vector<8x32xf32> to vector<8x32xbf16>
    %c0_1 = arith.constant 0 : index
    %c0_2 = arith.constant 0 : index
    %2 = vector.load %arg2[%c0_1, %c0_2] : memref<160x128xbf16, #tpu.memory_space<vmem>>, vector<32x128xbf16>
    %cst = arith.constant dense<0.000000e+00> : vector<8x128xf32>
    %3 = tpu.matmul %1, %2, %cst {dimension_numbers = #tpu.dot_dimension_numbers<[1], [0], [0], [1], [0, 0, 1, 1], [], []>} : vector<8x32xbf16>, vector<32x128xbf16>, vector<8x128xf32> -> vector<8x128xf32>
    %c0_3 = arith.constant 0 : index
    %c0_4 = arith.constant 0 : index
    %4 = vector.load %arg4[%c0_3, %c0_4] : memref<8x128xf32, #tpu.memory_space<vmem>>, vector<1x128xf32>
    %5 = vector.broadcast %4 : vector<1x128xf32> to vector<8x128xf32>
    %6 = arith.addf %3, %5 : vector<8x128xf32>
    %cst_5 = arith.constant 0.000000e+00 : f32
    %7 = vector.broadcast %cst_5 : f32 to vector<8x128xf32>
    %8 = arith.maximumf %6, %7 : vector<8x128xf32>
    %9 = arith.truncf %8 : vector<8x128xf32> to vector<8x128xbf16>
    %c32 = arith.constant 32 : index
    %c0_6 = arith.constant 0 : index
    %10 = vector.load %arg2[%c32, %c0_6] : memref<160x128xbf16, #tpu.memory_space<vmem>>, vector<128x128xbf16>
    %cst_7 = arith.constant dense<0.000000e+00> : vector<8x128xf32>
    %11 = tpu.matmul %9, %10, %cst_7 {dimension_numbers = #tpu.dot_dimension_numbers<[1], [0], [0], [1], [0, 0, 1, 1], [], []>} : vector<8x128xbf16>, vector<128x128xbf16>, vector<8x128xf32> -> vector<8x128xf32>
    %c1 = arith.constant 1 : index
    %c0_8 = arith.constant 0 : index
    %12 = vector.load %arg4[%c1, %c0_8] : memref<8x128xf32, #tpu.memory_space<vmem>>, vector<1x128xf32>
    %13 = vector.broadcast %12 : vector<1x128xf32> to vector<8x128xf32>
    %14 = arith.addf %11, %13 : vector<8x128xf32>
    %cst_9 = arith.constant 0.000000e+00 : f32
    %15 = vector.broadcast %cst_9 : f32 to vector<8x128xf32>
    %16 = arith.maximumf %14, %15 : vector<8x128xf32>
    %17 = arith.truncf %16 : vector<8x128xf32> to vector<8x128xbf16>
    %c0_10 = arith.constant 0 : index
    %c0_11 = arith.constant 0 : index
    %18 = vector.load %arg3[%c0_10, %c0_11] : memref<128x128xbf16, #tpu.memory_space<vmem>>, vector<128x128xbf16>
    %cst_12 = arith.constant dense<0.000000e+00> : vector<8x128xf32>
    %19 = tpu.matmul %17, %18, %cst_12 {dimension_numbers = #tpu.dot_dimension_numbers<[1], [0], [0], [1], [0, 0, 1, 1], [], []>} : vector<8x128xbf16>, vector<128x128xbf16>, vector<8x128xf32> -> vector<8x128xf32>
    %c0_13 = arith.constant 0 : index
    %c0_14 = arith.constant 0 : index
    %20 = vector.load %arg5[%c0_13, %c0_14] : memref<8x128xf32, #tpu.memory_space<vmem>>, vector<1x128xf32>
    %21 = vector.broadcast %20 : vector<1x128xf32> to vector<8x128xf32>
    %22 = arith.addf %19, %21 : vector<8x128xf32>
    %c0_15 = arith.constant 0 : index
    %c0_16 = arith.constant 0 : index
    %23 = vector.load %arg6[%c0_15, %c0_16] : memref<8x128xf32, #tpu.memory_space<vmem>>, vector<8x128xf32>
    tpu.vector_store %arg6[%c0_15, %c0_16], %22 {strides = array<i32>} : memref<8x128xf32, #tpu.memory_space<vmem>>, vector<8x128xf32>,
    return
  }
  func.func @transform_0(%arg0: i32) -> (i32, i32) {
    %c0_i32 = arith.constant 0 : i32
    %c0_i32_0 = arith.constant 0 : i32
    return %arg0, %c0_i32 : i32, i32
  }
  func.func @transform_1(%arg0: i32) -> (i32, i32) {
    %c0_i32 = arith.constant 0 : i32
    %c0_i32_0 = arith.constant 0 : i32
    %c0_i32_1 = arith.constant 0 : i32
    return %c0_i32, %c0_i32_0 : i32, i32
  }
  func.func @transform_2(%arg0: i32) -> (i32, i32) {
    %c0_i32 = arith.constant 0 : i32
    %c0_i32_0 = arith.constant 0 : i32
    %c0_i32_1 = arith.constant 0 : i32
    return %c0_i32, %c0_i32_0 : i32, i32
  }
  func.func @transform_3(%arg0: i32) -> (i32, i32) {
    %c0_i32 = arith.constant 0 : i32
    %c0_i32_0 = arith.constant 0 : i32
    %c0_i32_1 = arith.constant 0 : i32
    return %c0_i32, %c0_i32_0 : i32, i32
  }
  func.func @transform_4(%arg0: i32) -> (i32, i32) {
    %c0_i32 = arith.constant 0 : i32
    %c0_i32_0 = arith.constant 0 : i32
    %c0_i32_1 = arith.constant 0 : i32
    return %c0_i32, %c0_i32_0 : i32, i32
  }
  func.func @transform_5(%arg0: i32) -> (i32, i32) {
    %c0_i32 = arith.constant 0 : i32
    %c0_i32_0 = arith.constant 0 : i32
    return %arg0, %c0_i32 : i32, i32
  }
}

</mosaic_0001>

<llo_original>
// kernel: tpu_custom_call.1
$region0: #{tpu_custom_call.1}
  #allocation0 [shape = 'u32[]', space=smem, size = 0x4, offset = 0x4, fixed_abs, tag = 'smem constant byte address 0x4 - core index']
  #allocation1 [shape = 'u32[72,128]{1,0:T(1,128)}', space=vmem, size = 0x9000, scoped, tag = 'internal scratch']
  %s0 = inlined_call_operand.hbm [shape: f32[8,32], index: 0, kind: input, shape index: {}]
  %s1 = inlined_call_operand.hbm [shape: bf16[160,128], index: 1, kind: input, shape index: {}]
  %s2 = inlined_call_operand.hbm [shape: bf16[128,128], index: 2, kind: input, shape index: {}]
  %s3 = inlined_call_operand.hbm [shape: f32[8,128], index: 3, kind: input, shape index: {}]
  %s4 = inlined_call_operand.hbm [shape: f32[8,128], index: 4, kind: input, shape index: {}]
  %s5 = inlined_call_operand.hbm [shape: f32[8,128], index: 5, kind: output, shape index: {}]
  %s6 = sld [smem:[#allocation0]]
  $region50: #{tpu_custom_call.1} parent=0
    _
  %s8 = ssub.s32 1, %s6
  %s9 = scalar_select 0, %s8, %s6
  $region1: #{tpu_custom_call.1} parent=0
    #allocation2 [shape = 'u8[4096]{0}', space=vmem, size = 0x1000, scoped, tag = 'input window, operand 0, single buffered']
    #allocation3 [shape = 's32[1]{0}', space=sflag, size = 0x4, scoped, tag = 'scoped memory for tpu_custom_call.1']
    #allocation4 [shape = 's32[1]{0}', space=sflag, size = 0x4, scoped, tag = 'scoped memory for tpu_custom_call.1']
    #allocation5 [shape = 'u8[40960]{0}', space=vmem, size = 0xa000, scoped, tag = 'input window, operand 1, single buffered']
    #allocation6 [shape = 's32[1]{0}', space=sflag, size = 0x4, scoped, tag = 'scoped memory for tpu_custom_call.1']
    #allocation7 [shape = 'u8[32768]{0}', space=vmem, size = 0x8000, scoped, tag = 'input window, operand 2, single buffered']
    #allocation8 [shape = 'u8[4096]{0}', space=vmem, size = 0x1000, scoped, tag = 'input window, operand 3, single buffered']
    #allocation9 [shape = 's32[1]{0}', space=sflag, size = 0x4, scoped, tag = 'scoped memory for tpu_custom_call.1']
    #allocation10 [shape = 'u8[4096]{0}', space=vmem, size = 0x1000, scoped, tag = 'input window, operand 4, single buffered']
    #allocation11 [shape = 'u8[4096]{0}', space=vmem, size = 0x1000, scoped, tag = 'output window, operand 0, single buffered']
    %10 = vsyncpa [#allocation3], 0
    %11 = vsyncpa [#allocation6], 0
    %12 = vsyncpa [#allocation9], 0
    %13 = vsyncpa [#allocation4], 0
    // Predicated region
    $region2: #{tpu_custom_call.1} parent=1 // pred_check
      _
    $region3: #{tpu_custom_call.1} parent=1 // pred_check_branch
      %15 = sbr.rel (0) target = $region5
    $region4: #{tpu_custom_call.1} parent=1 // pred_region
      %17 = vsyncadd [#allocation3], 0
      %s19 = sshll.u32 %s0, 4
      %s20 = int_to_ptr.hbm [resolvable:$true] %s19
      %s21 = sshll.u32 [#allocation2], 4
      %s22 = int_to_ptr.vmem [resolvable:$true] %s21
      %24 = dma.hbm_to_vmem [thread:$0]  %s20, 128, %s22, [#allocation3]
    $region5: #{tpu_custom_call.1} parent=1 // pred_fallthru
      _
    // Predicated region
    $region6: #{tpu_custom_call.1} parent=1 // pred_check
      _
    $region7: #{tpu_custom_call.1} parent=1 // pred_check_branch
      %26 = sbr.rel (0) target = $region9
    $region8: #{tpu_custom_call.1} parent=1 // pred_region
      %28 = vsyncadd [#allocation6], 0
      %s29 = sshll.u32 %s1, 4
      %s30 = int_to_ptr.hbm [resolvable:$true] %s29
      %s31 = sshll.u32 [#allocation5], 4
      %s32 = int_to_ptr.vmem [resolvable:$true] %s31
      %37 = dma.hbm_to_vmem [thread:$0]  %s30, 1280, %s32, [#allocation6], 64, 64, 4
    $region9: #{tpu_custom_call.1} parent=1 // pred_fallthru
      _
    // Predicated region
    $region10: #{tpu_custom_call.1} parent=1 // pred_check
      _
    $region11: #{tpu_custom_call.1} parent=1 // pred_check_branch
      %39 = sbr.rel (0) target = $region13
    $region12: #{tpu_custom_call.1} parent=1 // pred_region
      %41 = vsyncadd [#allocation6], 0
      %s42 = sshll.u32 %s2, 4
      %s43 = int_to_ptr.hbm [resolvable:$true] %s42
      %s44 = sshll.u32 [#allocation7], 4
      %s45 = int_to_ptr.vmem [resolvable:$true] %s44
      %50 = dma.hbm_to_vmem [thread:$0]  %s43, 1024, %s45, [#allocation6], 64, 64, 4
    $region13: #{tpu_custom_call.1} parent=1 // pred_fallthru
      _
    // Predicated region
    $region14: #{tpu_custom_call.1} parent=1 // pred_check
      _
    $region15: #{tpu_custom_call.1} parent=1 // pred_check_branch
      %52 = sbr.rel (0) target = $region17
    $region16: #{tpu_custom_call.1} parent=1 // pred_region
      %54 = vsyncadd [#allocation9], 0
      %s56 = sshll.u32 %s3, 4
      %s57 = int_to_ptr.hbm [resolvable:$true] %s56
      %s58 = sshll.u32 [#allocation8], 4
      %s59 = int_to_ptr.vmem [resolvable:$true] %s58
      %61 = dma.hbm_to_vmem [thread:$0]  %s57, 128, %s59, [#allocation9]
    $region17: #{tpu_custom_call.1} parent=1 // pred_fallthru
      _
    // Predicated region
    $region18: #{tpu_custom_call.1} parent=1 // pred_check
      _
    $region19: #{tpu_custom_call.1} parent=1 // pred_check_branch
      %63 = sbr.rel (0) target = $region21
    $region20: #{tpu_custom_call.1} parent=1 // pred_region
      %65 = vsyncadd [#allocation9], 0
      %s67 = sshll.u32 %s4, 4
      %s68 = int_to_ptr.hbm [resolvable:$true] %s67
      %s69 = sshll.u32 [#allocation10], 4
      %s70 = int_to_ptr.vmem [resolvable:$true] %s69
      %72 = dma.hbm_to_vmem [thread:$0]  %s68, 128, %s70, [#allocation9]
    $region21: #{tpu_custom_call.1} parent=1 // pred_fallthru
      _
    // Predicated region
    $region22: #{tpu_custom_call.1} parent=1 // pred_check
      _
    $region23: #{tpu_custom_call.1} parent=1 // pred_check_branch
      %74 = sbr.rel (0) target = $region25
    $region24: #{tpu_custom_call.1} parent=1 // pred_region
      %76 = dma.done [#allocation3], 128
    $region25: #{tpu_custom_call.1} parent=1 // pred_fallthru
      _
    // Predicated region
    $region26: #{tpu_custom_call.1} parent=1 // pred_check
      _
    $region27: #{tpu_custom_call.1} parent=1 // pred_check_branch
      %78 = sbr.rel (0) target = $region29
    $region28: #{tpu_custom_call.1} parent=1 // pred_region
      %80 = dma.done [#allocation6], 1280
    $region29: #{tpu_custom_call.1} parent=1 // pred_fallthru
      _
    // Predicated region
    $region30: #{tpu_custom_call.1} parent=1 // pred_check
      _
    $region31: #{tpu_custom_call.1} parent=1 // pred_check_branch
      %82 = sbr.rel (0) target = $region33
    $region32: #{tpu_custom_call.1} parent=1 // pred_region
      %84 = dma.done [#allocation6], 1024
    $region33: #{tpu_custom_call.1} parent=1 // pred_fallthru
      _
    // Predicated region
    $region34: #{tpu_custom_call.1} parent=1 // pred_check
      _
    $region35: #{tpu_custom_call.1} parent=1 // pred_check_branch
      %86 = sbr.rel (0) target = $region37
    $region36: #{tpu_custom_call.1} parent=1 // pred_region
      %88 = dma.done [#allocation9], 128
    $region37: #{tpu_custom_call.1} parent=1 // pred_fallthru
      _
    // Predicated region
    $region38: #{tpu_custom_call.1} parent=1 // pred_check
      _
    $region39: #{tpu_custom_call.1} parent=1 // pred_check_branch
      %90 = sbr.rel (0) target = $region41
    $region40: #{tpu_custom_call.1} parent=1 // pred_region
      %92 = dma.done [#allocation9], 128
    $region41: #{tpu_custom_call.1} parent=1 // pred_fallthru
      _
    %v94 = vld [vmem:[#allocation2] sm:$0xff]
    %v95 = vpack.c.bf16 %v94, %v94
    %v96 = vld [vmem:[#allocation5] sm:$0xf]
    %v97 = vld [vmem:[#allocation5 + $0x4] sm:$0xf]
    %v98 = vld [vmem:[#allocation5 + $0x8] sm:$0xf]
    %v99 = vld [vmem:[#allocation5 + $0xc] sm:$0xf]
    %v100 = vld [vmem:[#allocation8] sm:$0x1]
    %v101 = vperm.slane %v100, 0
    %v106 = vunpack.c.l.b16 %v96
    %v107 = vunpack.c.l.b16 %v97
    %v108 = vunpack.c.l.b16 %v98
    %v109 = vunpack.c.l.b16 %v99
    %v110 = vpack.c.b16 %v107, %v106
    %v111 = vpack.c.b16 %v109, %v108
    %vm114 = vcmask 261120
    %v116 = vsel %vm114, %v95, 0
    %118 = vmatpush.bf16.msra.mxu0 0
    %119 = vmatpush.bf16.msra.mxu0 0
    %120 = vmatpush.bf16.msra.mxu0 0
    %121 = vmatpush.bf16.msra.mxu0 0
    %122 = vmatpush.bf16.msra.mxu0 0
    %123 = vmatpush.bf16.msra.mxu0 0
    %124 = vmatpush.bf16.msra.mxu0 %v111
    %125 = vmatpush.bf16.msra.mxu0 %v110
    %126 = vmatmul.bf16.gmra.mxu0 %v116
    %v127 = vpop.f32.mrf.mxu0
    %v128 = vadd.f32 %v101, %v127
    %v129 = vpop.f32.mrf.mxu0
    %130 = vdwg.mxu0
    %v131 = vmax.f32 %v128, 0.0
    %v132 = vpack.c.bf16 %v131, %v131
    %v133 = vld [vmem:[#allocation5 + $0x10] sm:$0xf]
    %v134 = vld [vmem:[#allocation5 + $0x14] sm:$0xf]
    %v135 = vld [vmem:[#allocation5 + $0x18] sm:$0xf]
    %v136 = vld [vmem:[#allocation5 + $0x1c] sm:$0xf]
    %v137 = vld [vmem:[#allocation5 + $0x20] sm:$0xf]
    %v138 = vld [vmem:[#allocation5 + $0x24] sm:$0xf]
    %v139 = vld [vmem:[#allocation5 + $0x28] sm:$0xf]
    %v140 = vld [vmem:[#allocation5 + $0x2c] sm:$0xf]
    %v141 = vld [vmem:[#allocation5 + $0x30] sm:$0xf]
    %v142 = vld [vmem:[#allocation5 + $0x34] sm:$0xf]
    %v143 = vld [vmem:[#allocation5 + $0x38] sm:$0xf]
    %v144 = vld [vmem:[#allocation5 + $0x3c] sm:$0xf]
    %v145 = vld [vmem:[#allocation5 + $0x40] sm:$0xf]
    %v146 = vld [vmem:[#allocation5 + $0x44] sm:$0xf]
    %v147 = vld [vmem:[#allocation5 + $0x48] sm:$0xf]
    %v148 = vld [vmem:[#allocation5 + $0x4c] sm:$0xf]
    %v149 = vld [vmem:[#allocation8 + $0x1] sm:$0x1]
    %v150 = vperm.slane %v149, 0
    %v167 = vunpack.c.l.b16 %v133
    %v168 = vunpack.c.l.b16 %v134
    %v169 = vunpack.c.l.b16 %v135
    %v170 = vunpack.c.l.b16 %v136
    %v171 = vunpack.c.l.b16 %v137
    %v172 = vunpack.c.l.b16 %v138
    %v173 = vunpack.c.l.b16 %v139
    %v174 = vunpack.c.l.b16 %v140
    %v175 = vunpack.c.l.b16 %v141
    %v176 = vunpack.c.l.b16 %v142
    %v177 = vunpack.c.l.b16 %v143
    %v178 = vunpack.c.l.b16 %v144
    %v179 = vunpack.c.l.b16 %v145
    %v180 = vunpack.c.l.b16 %v146
    %v181 = vunpack.c.l.b16 %v147
    %v182 = vunpack.c.l.b16 %v148
    %v183 = vpack.c.b16 %v168, %v167
    %v184 = vpack.c.b16 %v170, %v169
    %v185 = vpack.c.b16 %v172, %v171
    %v186 = vpack.c.b16 %v174, %v173
    %v187 = vpack.c.b16 %v176, %v175
    %v188 = vpack.c.b16 %v178, %v177
    %v189 = vpack.c.b16 %v180, %v179
    %v190 = vpack.c.b16 %v182, %v181
    %199 = vmatpush.bf16.msra.mxu0 %v190
    %200 = vmatpush.bf16.msra.mxu0 %v189
    %201 = vmatpush.bf16.msra.mxu0 %v188
    %202 = vmatpush.bf16.msra.mxu0 %v187
    %203 = vmatpush.bf16.msra.mxu0 %v186
    %204 = vmatpush.bf16.msra.mxu0 %v185
    %205 = vmatpush.bf16.msra.mxu0 %v184
    %206 = vmatpush.bf16.msra.mxu0 %v183
    %207 = vmatmul.bf16.gmra.mxu0 %v132
    %v208 = vpop.f32.mrf.mxu0
    %v209 = vadd.f32 %v150, %v208
    %v210 = vpop.f32.mrf.mxu0
    %211 = vdwg.mxu0
    %v212 = vmax.f32 %v209, 0.0
    %v213 = vpack.c.bf16 %v212, %v212
    %v214 = vld [vmem:[#allocation7] sm:$0xf]
    %v215 = vld [vmem:[#allocation7 + $0x4] sm:$0xf]
    %v216 = vld [vmem:[#allocation7 + $0x8] sm:$0xf]
    %v217 = vld [vmem:[#allocation7 + $0xc] sm:$0xf]
    %v218 = vld [vmem:[#allocation7 + $0x10] sm:$0xf]
    %v219 = vld [vmem:[#allocation7 + $0x14] sm:$0xf]
    %v220 = vld [vmem:[#allocation7 + $0x18] sm:$0xf]
    %v221 = vld [vmem:[#allocation7 + $0x1c] sm:$0xf]
    %v222 = vld [vmem:[#allocation7 + $0x20] sm:$0xf]
    %v223 = vld [vmem:[#allocation7 + $0x24] sm:$0xf]
    %v224 = vld [vmem:[#allocation7 + $0x28] sm:$0xf]
    %v225 = vld [vmem:[#allocation7 + $0x2c] sm:$0xf]
    %v226 = vld [vmem:[#allocation7 + $0x30] sm:$0xf]
    %v227 = vld [vmem:[#allocation7 + $0x34] sm:$0xf]
    %v228 = vld [vmem:[#allocation7 + $0x38] sm:$0xf]
    %v229 = vld [vmem:[#allocation7 + $0x3c] sm:$0xf]
    %v230 = vld [vmem:[#allocation10] sm:$0x1]
    %v231 = vperm.slane %v230, 0
    %v248 = vunpack.c.l.b16 %v214
    %v249 = vunpack.c.l.b16 %v215
    %v250 = vunpack.c.l.b16 %v216
    %v251 = vunpack.c.l.b16 %v217
    %v252 = vunpack.c.l.b16 %v218
    %v253 = vunpack.c.l.b16 %v219
    %v254 = vunpack.c.l.b16 %v220
    %v255 = vunpack.c.l.b16 %v221
    %v256 = vunpack.c.l.b16 %v222
    %v257 = vunpack.c.l.b16 %v223
    %v258 = vunpack.c.l.b16 %v224
    %v259 = vunpack.c.l.b16 %v225
    %v260 = vunpack.c.l.b16 %v226
    %v261 = vunpack.c.l.b16 %v227
    %v262 = vunpack.c.l.b16 %v228
    %v263 = vunpack.c.l.b16 %v229
    %v264 = vpack.c.b16 %v249, %v248
    %v265 = vpack.c.b16 %v251, %v250
    %v266 = vpack.c.b16 %v253, %v252
    %v267 = vpack.c.b16 %v255, %v254
    %v268 = vpack.c.b16 %v257, %v256
    %v269 = vpack.c.b16 %v259, %v258
    %v270 = vpack.c.b16 %v261, %v260
    %v271 = vpack.c.b16 %v263, %v262
    %280 = vmatpush.bf16.msra.mxu0 %v271
    %281 = vmatpush.bf16.msra.mxu0 %v270
    %282 = vmatpush.bf16.msra.mxu0 %v269
    %283 = vmatpush.bf16.msra.mxu0 %v268
    %284 = vmatpush.bf16.msra.mxu0 %v267
    %285 = vmatpush.bf16.msra.mxu0 %v266
    %286 = vmatpush.bf16.msra.mxu0 %v265
    %287 = vmatpush.bf16.msra.mxu0 %v264
    %288 = vmatmul.bf16.gmra.mxu0 %v213
    %v289 = vpop.f32.mrf.mxu0
    %v290 = vadd.f32 %v231, %v289
    %v291 = vpop.f32.mrf.mxu0
    %292 = vdwg.mxu0
    %293 = vst [vmem:[#allocation11] sm:$0xff] %v290
    // Predicated region
    $region42: #{tpu_custom_call.1} parent=1 // pred_check
      _
    $region43: #{tpu_custom_call.1} parent=1 // pred_check_branch
      %295 = sbr.rel (0) target = $region45
    $region44: #{tpu_custom_call.1} parent=1 // pred_region
      %297 = vsyncadd [#allocation4], 0
      %s299 = sshll.u32 [#allocation11], 4
      %s300 = int_to_ptr.vmem [resolvable:$true] %s299
      %s301 = sshll.u32 %s5, 4
      %s302 = int_to_ptr.hbm [resolvable:$true] %s301
      %304 = dma.vmem_to_hbm [thread:$0]  %s300, 128, %s302, [#allocation4]
    $region45: #{tpu_custom_call.1} parent=1 // pred_fallthru
      _
    // Predicated region
    $region46: #{tpu_custom_call.1} parent=1 // pred_check
      _
    $region47: #{tpu_custom_call.1} parent=1 // pred_check_branch
      %306 = sbr.rel (0) target = $region49
    $region48: #{tpu_custom_call.1} parent=1 // pred_region
      %308 = dma.done [#allocation4], 128
    $region49: #{tpu_custom_call.1} parent=1 // pred_fallthru
      _
    %309 = vsyncpa [#allocation3], 1
    %310 = vsyncpa [#allocation6], 1
    %311 = vsyncpa [#allocation9], 1
    %312 = vsyncpa [#allocation4], 1

</llo_original>
